<compile_context>
chip_gen: v5e
topology: v5e:2x2
jax: 0.10.0
libtpu: 0.0.40
codegen_flags: <defaults>
</compile_context>

<pallas_src>
import math

import jax
import jax.numpy as jnp
from jax.experimental import pallas as pl
from jax.experimental.pallas import tpu as pltpu

HIDD = 2
NFEATS = 5
HIDW = NFEATS
N_CLASSES = 2
N_LAYERS = HIDD + 1          # three GraphConv layers
WCAT_ROWS = 2 * HIDW         # powers (0, 1) -> concat([K_p0, K_p1], axis=0)
WCAT_COLS = HIDW             # widest layer output; layer 3 zero-padded 2 -> 5


def gcn_kernel(x_ref, adj_ref, w_ref, o_ref):
    """Full 3-layer GCN forward for one graph, everything resident in VMEM.

    w_ref: (3, 2*HIDW, HIDW) packed weights; w_ref[l] = concat([K_p0, K_p1], 0)
    for layer l, with layer 3 zero-padded from N_CLASSES -> HIDW columns
    (the padded columns are never read: only logits[:, :2] feed the softmax).
    """
    x = x_ref[...]
    adj = adj_ref[...]

    def graph_conv(h, wcat):
        # powers = (0, 1): support = h @ K0 + (adj @ h) @ K1
        # Fused: one MXU pass over the lane-concatenated features.
        ax = jnp.dot(adj, h, preferred_element_type=jnp.float32)
        h2 = jnp.concatenate([h, ax], axis=1)            # (N, 2*HIDW)
        return jnp.dot(h2, wcat, preferred_element_type=jnp.float32)

    # Layer 1 + 2: relu
    h = jnp.maximum(graph_conv(x, w_ref[0]), 0.0)
    h = jnp.maximum(graph_conv(h, w_ref[1]), 0.0)
    # Layer 3: logits live in columns 0 and 1 (rest are zero-pad columns).
    logits = graph_conv(h, w_ref[2])

    # 2-class log_softmax closed form (no XLU cross-lane reductions):
    #   out0 = -softplus(l1 - l0),  out1 = -softplus(l0 - l1)
    d = logits[:, 1:2] - logits[:, 0:1]

    def softplus(v):
        # numerically stable: max(v, 0) + log(1 + exp(-|v|))
        return jnp.maximum(v, 0.0) + jnp.log(1.0 + jnp.exp(-jnp.abs(v)))

    out = jnp.concatenate([-softplus(d), -softplus(-d)], axis=1)
    o_ref[...] = out.astype(o_ref.dtype)


def pack_weights(params):
    """Concatenate the (K_p0, K_p1) pair of each layer along the input axis and
    stack all layers into one zero-padded (3, 2*HIDW, HIDW) tensor."""
    w10, w11, w20, w21, w30, w31 = params
    w1 = jnp.concatenate([w10, w11], axis=0)                       # (10, 5)
    w2 = jnp.concatenate([w20, w21], axis=0)                       # (10, 5)
    w3 = jnp.concatenate([w30, w31], axis=0)                       # (10, 2)
    w3 = jnp.pad(w3, ((0, 0), (0, WCAT_COLS - N_CLASSES)))          # (10, 5)
    return jnp.stack([w1, w2, w3], axis=0)                          # (3, 10, 5)


def gcn_forward(x, adj, params):
    """Run the full 3-layer GCN forward in a single Pallas invocation.

    Shapes are tiny (N nodes x 5 feats), so every operand lives whole in VMEM
    and the grid is trivial (single program). For large N, tile adj over a
    parallel row grid and cast the adj@h operands to bf16 (see notes)."""
    N = x.shape[0]
    w_packed = pack_weights(params)
    vmem = pl.BlockSpec(memory_space=pltpu.MemorySpace.VMEM)
    return pl.pallas_call(
        gcn_kernel,
        out_shape=jax.ShapeDtypeStruct((N, N_CLASSES), jnp.float32),
        in_specs=[vmem, vmem, vmem],
        out_specs=vmem,
    )(x, adj, w_packed)


def init_params(key):
    """Deterministic init mimicking GraphConv.reset_parameters:
    uniform(-1/sqrt(n_out), 1/sqrt(n_out)) per kernel."""
    shapes = [
        (NFEATS, HIDW), (NFEATS, HIDW),        # conv1: K_power0, K_power1
        (HIDW, HIDW), (HIDW, HIDW),            # conv2
        (HIDW, N_CLASSES), (HIDW, N_CLASSES),  # conv3
    ]
    params = []
    for s in shapes:
        key, sub = jax.random.split(key)
        stdv = 1.0 / math.sqrt(s[1])
        params.append(jax.random.uniform(sub, s, jnp.float32, -stdv, stdv))
    return params


def gcn_reference(x, adj, params):
    """Pure-JAX reference (mirrors the PyTorch forward) for correctness."""
    w10, w11, w20, w21, w30, w31 = params

    def gc(h, w0, w1):
        return h @ w0 + (adj @ h) @ w1

    h = jax.nn.relu(gc(x, w10, w11))
    h = jax.nn.relu(gc(h, w20, w21))
    return jax.nn.log_softmax(gc(h, w30, w31), axis=1)


if __name__ == "__main__":
    key = jax.random.PRNGKey(0)
    k_x, k_adj, k_param = jax.random.split(key, 3)

    N = 8  # number of graph nodes
    x = jax.random.normal(k_x, (N, NFEATS), dtype=jnp.float32)

    # Deterministic symmetric adjacency with self-loops, row-normalized.
    a = (jax.random.uniform(k_adj, (N, N)) > 0.5).astype(jnp.float32)
    a = jnp.maximum(a, a.T) + jnp.eye(N, dtype=jnp.float32)
    adj = a / jnp.sum(a, axis=1, keepdims=True)

    params = init_params(k_param)

    out = gcn_forward(x, adj, params)
    out = jax.block_until_ready(out)

    ref = gcn_reference(x, adj, params)
    assert out.shape == (N, N_CLASSES)
    assert jnp.allclose(out, ref, atol=1e-5, rtol=1e-5), "mismatch vs reference"

    print("KERNEL_OK")
</pallas_src>

<mosaic_0001>
module attributes {stable_mosaic.version = 11 : i64} {
  func.func @gcn_kernel(%arg0: memref<8x5xf32, #tpu.memory_space<vmem>>, %arg1: memref<8x8xf32, #tpu.memory_space<vmem>>, %arg2: memref<3x10x5xf32, #tpu.memory_space<vmem>>, %arg3: memref<8x2xf32, #tpu.memory_space<vmem>>) attributes {dimension_semantics = [], scalar_prefetch = 0 : i64, scratch_operands = 0 : i64, tpu.core_type = #tpu.core_type<tc>} {
    %c0 = arith.constant 0 : index
    %c0_0 = arith.constant 0 : index
    %0 = vector.load %arg0[%c0, %c0_0] : memref<8x5xf32, #tpu.memory_space<vmem>>, vector<8x5xf32>
    %c0_1 = arith.constant 0 : index
    %c0_2 = arith.constant 0 : index
    %1 = vector.load %arg1[%c0_1, %c0_2] : memref<8x8xf32, #tpu.memory_space<vmem>>, vector<8x8xf32>
    %c0_3 = arith.constant 0 : index
    %c0_4 = arith.constant 0 : index
    %c0_5 = arith.constant 0 : index
    %2 = vector.load %arg2[%c0_3, %c0_4, %c0_5] : memref<3x10x5xf32, #tpu.memory_space<vmem>>, vector<1x10x5xf32>
    %3 = vector.shape_cast %2 : vector<1x10x5xf32> to vector<10x5xf32>
    %cst = arith.constant dense<0.000000e+00> : vector<8x5xf32>
    %4 = tpu.matmul %1, %0, %cst {dimension_numbers = #tpu.dot_dimension_numbers<[1], [0], [0], [1], [0, 0, 1, 1], [], []>} : vector<8x8xf32>, vector<8x5xf32>, vector<8x5xf32> -> vector<8x5xf32>
    %5 = tpu.concatenate %0, %4 in 1 : vector<8x5xf32>, vector<8x5xf32> -> vector<8x10xf32>
    %cst_6 = arith.constant dense<0.000000e+00> : vector<8x5xf32>
    %6 = tpu.matmul %5, %3, %cst_6 {dimension_numbers = #tpu.dot_dimension_numbers<[1], [0], [0], [1], [0, 0, 1, 1], [], []>} : vector<8x10xf32>, vector<10x5xf32>, vector<8x5xf32> -> vector<8x5xf32>
    %cst_7 = arith.constant 0.000000e+00 : f32
    %7 = vector.broadcast %cst_7 : f32 to vector<8x5xf32>
    %8 = arith.maximumf %6, %7 : vector<8x5xf32>
    %c1 = arith.constant 1 : index
    %c0_8 = arith.constant 0 : index
    %c0_9 = arith.constant 0 : index
    %9 = vector.load %arg2[%c1, %c0_8, %c0_9] : memref<3x10x5xf32, #tpu.memory_space<vmem>>, vector<1x10x5xf32>
    %10 = vector.shape_cast %9 : vector<1x10x5xf32> to vector<10x5xf32>
    %cst_10 = arith.constant dense<0.000000e+00> : vector<8x5xf32>
    %11 = tpu.matmul %1, %8, %cst_10 {dimension_numbers = #tpu.dot_dimension_numbers<[1], [0], [0], [1], [0, 0, 1, 1], [], []>} : vector<8x8xf32>, vector<8x5xf32>, vector<8x5xf32> -> vector<8x5xf32>
    %12 = tpu.concatenate %8, %11 in 1 : vector<8x5xf32>, vector<8x5xf32> -> vector<8x10xf32>
    %cst_11 = arith.constant dense<0.000000e+00> : vector<8x5xf32>
    %13 = tpu.matmul %12, %10, %cst_11 {dimension_numbers = #tpu.dot_dimension_numbers<[1], [0], [0], [1], [0, 0, 1, 1], [], []>} : vector<8x10xf32>, vector<10x5xf32>, vector<8x5xf32> -> vector<8x5xf32>
    %cst_12 = arith.constant 0.000000e+00 : f32
    %14 = vector.broadcast %cst_12 : f32 to vector<8x5xf32>
    %15 = arith.maximumf %13, %14 : vector<8x5xf32>
    %c2 = arith.constant 2 : index
    %c0_13 = arith.constant 0 : index
    %c0_14 = arith.constant 0 : index
    %16 = vector.load %arg2[%c2, %c0_13, %c0_14] : memref<3x10x5xf32, #tpu.memory_space<vmem>>, vector<1x10x5xf32>
    %17 = vector.shape_cast %16 : vector<1x10x5xf32> to vector<10x5xf32>
    %cst_15 = arith.constant dense<0.000000e+00> : vector<8x5xf32>
    %18 = tpu.matmul %1, %15, %cst_15 {dimension_numbers = #tpu.dot_dimension_numbers<[1], [0], [0], [1], [0, 0, 1, 1], [], []>} : vector<8x8xf32>, vector<8x5xf32>, vector<8x5xf32> -> vector<8x5xf32>
    %19 = tpu.concatenate %15, %18 in 1 : vector<8x5xf32>, vector<8x5xf32> -> vector<8x10xf32>
    %cst_16 = arith.constant dense<0.000000e+00> : vector<8x5xf32>
    %20 = tpu.matmul %19, %17, %cst_16 {dimension_numbers = #tpu.dot_dimension_numbers<[1], [0], [0], [1], [0, 0, 1, 1], [], []>} : vector<8x10xf32>, vector<10x5xf32>, vector<8x5xf32> -> vector<8x5xf32>
    %21 = vector.extract_strided_slice %20 {offsets = [0, 1], sizes = [8, 1], strides = [1, 1]} : vector<8x5xf32> to vector<8x1xf32>
    %22 = vector.extract_strided_slice %20 {offsets = [0, 0], sizes = [8, 1], strides = [1, 1]} : vector<8x5xf32> to vector<8x1xf32>
    %23 = arith.subf %21, %22 : vector<8x1xf32>
    %cst_17 = arith.constant 0.000000e+00 : f32
    %24 = vector.broadcast %cst_17 : f32 to vector<8x1xf32>
    %25 = arith.maximumf %23, %24 : vector<8x1xf32>
    %26 = math.absf %23 : vector<8x1xf32>
    %cst_18 = arith.constant 0.000000e+00 : f32
    %27 = vector.broadcast %cst_18 : f32 to vector<8x1xf32>
    %28 = arith.subf %27, %26 : vector<8x1xf32>
    %29 = math.exp %28 : vector<8x1xf32>
    %cst_19 = arith.constant 1.000000e+00 : f32
    %30 = vector.broadcast %cst_19 : f32 to vector<8x1xf32>
    %31 = arith.addf %30, %29 : vector<8x1xf32>
    %32 = math.log %31 : vector<8x1xf32>
    %33 = arith.addf %25, %32 : vector<8x1xf32>
    %cst_20 = arith.constant 0.000000e+00 : f32
    %34 = vector.broadcast %cst_20 : f32 to vector<8x1xf32>
    %35 = arith.subf %34, %33 : vector<8x1xf32>
    %cst_21 = arith.constant 0.000000e+00 : f32
    %36 = vector.broadcast %cst_21 : f32 to vector<8x1xf32>
    %37 = arith.subf %36, %23 : vector<8x1xf32>
    %cst_22 = arith.constant 0.000000e+00 : f32
    %38 = vector.broadcast %cst_22 : f32 to vector<8x1xf32>
    %39 = arith.maximumf %37, %38 : vector<8x1xf32>
    %40 = math.absf %37 : vector<8x1xf32>
    %cst_23 = arith.constant 0.000000e+00 : f32
    %41 = vector.broadcast %cst_23 : f32 to vector<8x1xf32>
    %42 = arith.subf %41, %40 : vector<8x1xf32>
    %43 = math.exp %42 : vector<8x1xf32>
    %cst_24 = arith.constant 1.000000e+00 : f32
    %44 = vector.broadcast %cst_24 : f32 to vector<8x1xf32>
    %45 = arith.addf %44, %43 : vector<8x1xf32>
    %46 = math.log %45 : vector<8x1xf32>
    %47 = arith.addf %39, %46 : vector<8x1xf32>
    %cst_25 = arith.constant 0.000000e+00 : f32
    %48 = vector.broadcast %cst_25 : f32 to vector<8x1xf32>
    %49 = arith.subf %48, %47 : vector<8x1xf32>
    %50 = tpu.concatenate %35, %49 in 1 : vector<8x1xf32>, vector<8x1xf32> -> vector<8x2xf32>
    %c0_26 = arith.constant 0 : index
    %c0_27 = arith.constant 0 : index
    %51 = vector.load %arg3[%c0_26, %c0_27] : memref<8x2xf32, #tpu.memory_space<vmem>>, vector<8x2xf32>
    tpu.vector_store %arg3[%c0_26, %c0_27], %50 {strides = array<i32>} : memref<8x2xf32, #tpu.memory_space<vmem>>, vector<8x2xf32>,
    return
  }
}

</mosaic_0001>

<llo_original>
// kernel: tpu_custom_call.1
$region0: #{tpu_custom_call.1}
  #allocation0 [shape = 'u32[]', space=smem, size = 0x4, offset = 0x4, fixed_abs, tag = 'smem constant byte address 0x4 - core index']
  #allocation1 [shape = 'u32[72,128]{1,0:T(1,128)}', space=vmem, size = 0x9000, scoped, tag = 'internal scratch']
  %s0 = inlined_call_operand.vmem [shape: f32[8,5], index: 0, kind: input, shape index: {}]
  %s1 = inlined_call_operand.vmem [shape: f32[8,8], index: 1, kind: input, shape index: {}]
  %s2 = inlined_call_operand.vmem [shape: f32[3,10,5], index: 2, kind: input, shape index: {}]
  %s3 = inlined_call_operand.vmem [shape: f32[8,2], index: 3, kind: output, shape index: {}]
  %s4 = sld [smem:[#allocation0]]
  $region22: #{tpu_custom_call.1} parent=0
    _
  %s6 = ssub.s32 1, %s4
  %s7 = scalar_select 0, %s6, %s4
  // Predicated region
  $region2: #{tpu_custom_call.1} parent=0 // pred_check
    _
  $region3: #{tpu_custom_call.1} parent=0 // pred_check_branch
    %9 = sbr.rel (0) target = $region5
  $region4: #{tpu_custom_call.1} parent=0 // pred_region
    _
  $region5: #{tpu_custom_call.1} parent=0 // pred_fallthru
    _
  // Predicated region
  $region6: #{tpu_custom_call.1} parent=0 // pred_check
    _
  $region7: #{tpu_custom_call.1} parent=0 // pred_check_branch
    %11 = sbr.rel (0) target = $region9
  $region8: #{tpu_custom_call.1} parent=0 // pred_region
    _
  $region9: #{tpu_custom_call.1} parent=0 // pred_fallthru
    _
  // Predicated region
  $region10: #{tpu_custom_call.1} parent=0 // pred_check
    _
  $region11: #{tpu_custom_call.1} parent=0 // pred_check_branch
    %13 = sbr.rel (0) target = $region13
  $region12: #{tpu_custom_call.1} parent=0 // pred_region
    _
  $region13: #{tpu_custom_call.1} parent=0 // pred_fallthru
    _
  %v14 = vld [vmem:[%s0] sm:$0xff]
  %v15 = vld [vmem:[%s1] sm:$0xff]
  %v16 = vld [vmem:[%s2] sm:$0xff]
  %v17 = vld [vmem:[%s2 + $0x8] sm:$0x3]
  %vm18 = vcmask 64512
  %v20 = vsel %vm18, %v15, 0
  %22 = vmatpush.msra.mxu0 0.0
  %23 = vmatpush.msra.mxu0 0.0
  %24 = vmatpush.msra.mxu0 0.0
  %25 = vmatpush.msra.mxu0 0.0
  %26 = vmatpush.msra.mxu0 0.0
  %27 = vmatpush.msra.mxu0 0.0
  %28 = vmatpush.msra.mxu0 0.0
  %29 = vmatpush.msra.mxu0 0.0
  %30 = vmatpush.msra.mxu0 0.0
  %31 = vmatpush.msra.mxu0 0.0
  %32 = vmatpush.msra.mxu0 0.0
  %33 = vmatpush.msra.mxu0 0.0
  %34 = vmatpush.msra.mxu0 0.0
  %35 = vmatpush.msra.mxu0 0.0
  %36 = vmatpush.msra.mxu0 0.0
  %37 = vmatpush.msra.mxu0 %v14
  %38 = vmatmul.f32.gmra.mxu0 %v20
  %v39 = vpop.f32.mrf.mxu0
  %v40 = vadd.f32 0.0, %v39
  %41 = vdwg.mxu0
  %43 = vrot.lane.b32.xlu0 %v40, 5
  %v44 = vpop.permute.xlu0 %43
  %vm46 = vcmask 39936
  %v47 = vsel %vm46, %v14, %v44
  %vm48 = vcmask 80896
  %v50 = vsel %vm48, %v47, 0
  %vm52 = vcmask 1041408
  %v54 = vsel %vm52, %v17, 0
  %56 = vmatpush.msra.mxu0 0.0
  %57 = vmatpush.msra.mxu0 0.0
  %58 = vmatpush.msra.mxu0 0.0
  %59 = vmatpush.msra.mxu0 0.0
  %60 = vmatpush.msra.mxu0 0.0
  %61 = vmatpush.msra.mxu0 0.0
  %62 = vmatpush.msra.mxu0 0.0
  %63 = vmatpush.msra.mxu0 0.0
  %64 = vmatpush.msra.mxu0 0.0
  %65 = vmatpush.msra.mxu0 0.0
  %66 = vmatpush.msra.mxu0 0.0
  %67 = vmatpush.msra.mxu0 0.0
  %68 = vmatpush.msra.mxu0 0.0
  %69 = vmatpush.msra.mxu0 0.0
  %70 = vmatpush.msra.mxu0 %v54
  %71 = vmatpush.msra.mxu0 %v16
  %72 = vmatmul.f32.gmra.mxu0 %v50
  %v73 = vpop.f32.mrf.mxu0
  %v74 = vadd.f32 0.0, %v73
  %75 = vdwg.mxu0
  %v76 = vmax.f32 %v74, 0.0
  %s77 = scalar_lea.vmem %s2, 16
  %v78 = vld [vmem:[%s77] sm:$0xff]
  %v79 = vld [vmem:[%s77 + $0x8] sm:$0x3]
  %80 = vmatpush.msra.mxu0 0.0
  %81 = vmatpush.msra.mxu0 0.0
  %82 = vmatpush.msra.mxu0 0.0
  %83 = vmatpush.msra.mxu0 0.0
  %84 = vmatpush.msra.mxu0 0.0
  %85 = vmatpush.msra.mxu0 0.0
  %86 = vmatpush.msra.mxu0 0.0
  %87 = vmatpush.msra.mxu0 0.0
  %88 = vmatpush.msra.mxu0 0.0
  %89 = vmatpush.msra.mxu0 0.0
  %90 = vmatpush.msra.mxu0 0.0
  %91 = vmatpush.msra.mxu0 0.0
  %92 = vmatpush.msra.mxu0 0.0
  %93 = vmatpush.msra.mxu0 0.0
  %94 = vmatpush.msra.mxu0 0.0
  %95 = vmatpush.msra.mxu0 %v76
  %96 = vmatmul.f32.gmra.mxu0 %v20
  %v97 = vpop.f32.mrf.mxu0
  %v98 = vadd.f32 0.0, %v97
  %99 = vdwg.mxu0
  %101 = vrot.lane.b32.xlu0 %v98, 5
  %v102 = vpop.permute.xlu0 %101
  %v104 = vsel %vm46, %v76, %v102
  %v106 = vsel %vm48, %v104, 0
  %v109 = vsel %vm52, %v79, 0
  %111 = vmatpush.msra.mxu0 0.0
  %112 = vmatpush.msra.mxu0 0.0
  %113 = vmatpush.msra.mxu0 0.0
  %114 = vmatpush.msra.mxu0 0.0
  %115 = vmatpush.msra.mxu0 0.0
  %116 = vmatpush.msra.mxu0 0.0
  %117 = vmatpush.msra.mxu0 0.0
  %118 = vmatpush.msra.mxu0 0.0
  %119 = vmatpush.msra.mxu0 0.0
  %120 = vmatpush.msra.mxu0 0.0
  %121 = vmatpush.msra.mxu0 0.0
  %122 = vmatpush.msra.mxu0 0.0
  %123 = vmatpush.msra.mxu0 0.0
  %124 = vmatpush.msra.mxu0 0.0
  %125 = vmatpush.msra.mxu0 %v109
  %126 = vmatpush.msra.mxu0 %v78
  %127 = vmatmul.f32.gmra.mxu0 %v106
  %v128 = vpop.f32.mrf.mxu0
  %v129 = vadd.f32 0.0, %v128
  %130 = vdwg.mxu0
  %v131 = vmax.f32 %v129, 0.0
  %s132 = scalar_lea.vmem %s2, 32
  %v133 = vld [vmem:[%s132] sm:$0xff]
  %v134 = vld [vmem:[%s132 + $0x8] sm:$0x3]
  %135 = vmatpush.msra.mxu0 0.0
  %136 = vmatpush.msra.mxu0 0.0
  %137 = vmatpush.msra.mxu0 0.0
  %138 = vmatpush.msra.mxu0 0.0
  %139 = vmatpush.msra.mxu0 0.0
  %140 = vmatpush.msra.mxu0 0.0
  %141 = vmatpush.msra.mxu0 0.0
  %142 = vmatpush.msra.mxu0 0.0
  %143 = vmatpush.msra.mxu0 0.0
  %144 = vmatpush.msra.mxu0 0.0
  %145 = vmatpush.msra.mxu0 0.0
  %146 = vmatpush.msra.mxu0 0.0
  %147 = vmatpush.msra.mxu0 0.0
  %148 = vmatpush.msra.mxu0 0.0
  %149 = vmatpush.msra.mxu0 0.0
  %150 = vmatpush.msra.mxu0 %v131
  %151 = vmatmul.f32.gmra.mxu0 %v20
  %v152 = vpop.f32.mrf.mxu0
  %v153 = vadd.f32 0.0, %v152
  %154 = vdwg.mxu0
  %156 = vrot.lane.b32.xlu0 %v153, 5
  %v157 = vpop.permute.xlu0 %156
  %v159 = vsel %vm46, %v131, %v157
  %v161 = vsel %vm48, %v159, 0
  %v164 = vsel %vm52, %v134, 0
  %166 = vmatpush.msra.mxu0 0.0
  %167 = vmatpush.msra.mxu0 0.0
  %168 = vmatpush.msra.mxu0 0.0
  %169 = vmatpush.msra.mxu0 0.0
  %170 = vmatpush.msra.mxu0 0.0
  %171 = vmatpush.msra.mxu0 0.0
  %172 = vmatpush.msra.mxu0 0.0
  %173 = vmatpush.msra.mxu0 0.0
  %174 = vmatpush.msra.mxu0 0.0
  %175 = vmatpush.msra.mxu0 0.0
  %176 = vmatpush.msra.mxu0 0.0
  %177 = vmatpush.msra.mxu0 0.0
  %178 = vmatpush.msra.mxu0 0.0
  %179 = vmatpush.msra.mxu0 0.0
  %180 = vmatpush.msra.mxu0 %v164
  %181 = vmatpush.msra.mxu0 %v133
  %182 = vmatmul.f32.gmra.mxu0 %v161
  %v183 = vpop.f32.mrf.mxu0
  %v184 = vadd.f32 0.0, %v183
  %185 = vdwg.mxu0
  %187 = vrot.lane.b32.xlu0 %v184, 1
  %v188 = vpop.permute.xlu0 %187
  %v190 = vsub.f32 %v184, %v188
  %v191 = vmax.f32 %v190, 0.0
  %v192 = vand.u32 2147483647, %v190
  %v193 = vsub.f32 0.0, %v192
  %v194 = vmul.f32 %v193, 1.442695
  %v195 = vpow.pop %v194
  %v196 = vadd.f32 %v195, 1.0
  %v197 = vlog2.pop %v196
  %v198 = vmul.f32 %v197, 0.6931472
  %v199 = vadd.f32 %v191, %v198
  %v200 = vsub.f32 0.0, %v199
  %v201 = vsub.f32 0.0, %v190
  %v202 = vmax.f32 %v201, 0.0
  %v203 = vand.u32 2147483647, %v201
  %v204 = vsub.f32 0.0, %v203
  %v205 = vmul.f32 %v204, 1.442695
  %v206 = vpow.pop %v205
  %v207 = vadd.f32 %v206, 1.0
  %v208 = vlog2.pop %v207
  %v209 = vmul.f32 %v208, 0.6931472
  %v210 = vadd.f32 %v202, %v209
  %v211 = vsub.f32 0.0, %v210
  %213 = vrot.lane.b32.xlu0 %v200, 127
  %v214 = vpop.permute.xlu0 %213
  %vm216 = vcmask 7168
  %v217 = vsel %vm216, %v214, %v211
  %vm218 = vcmask 15360
  %219 = vst.msk [vmem:[%s3] sm:$0xff] %vm218, %v217
  // Predicated region
  $region14: #{tpu_custom_call.1} parent=0 // pred_check
    _
  $region15: #{tpu_custom_call.1} parent=0 // pred_check_branch
    %221 = sbr.rel (0) target = $region17
  $region16: #{tpu_custom_call.1} parent=0 // pred_region
    _
  $region17: #{tpu_custom_call.1} parent=0 // pred_fallthru
    _
  // Predicated region
  $region18: #{tpu_custom_call.1} parent=0 // pred_check
    _
  $region19: #{tpu_custom_call.1} parent=0 // pred_check_branch
    %223 = sbr.rel (0) target = $region21
  $region20: #{tpu_custom_call.1} parent=0 // pred_region
    _
  $region21: #{tpu_custom_call.1} parent=0 // pred_fallthru
    _

</llo_original>
